<compile_context>
chip_gen: v7x
topology: tpu7x:2x2x1
jax: 0.10.0
libtpu: 0.0.40
codegen_flags: <defaults>
</compile_context>

<pallas_src>
import functools

import jax
import jax.numpy as jnp
from jax.experimental import pallas as pl
from jax.experimental.pallas import tpu as pltpu

_BIG = 1e30  # "infinity" depth for missed pixels


def _round_up(x, m):
    return ((x + m - 1) // m) * m


def _render_kernel(coef_ref, pix_ref, out_ref,
                   zacc_ref, racc_ref, gacc_ref, bacc_ref, *, groups):
    """One (batch, pixel-tile, face-tile) grid step.

    coef_ref : (Ft, 18)  per-face affine coefficients (faces on sublanes)
    pix_ref  : (2, Pt)   pixel-center x / y (pixels on lanes)
    out_ref  : (8, Pt)   channel planes [r, g, b, alpha, zbuf, pad, pad, pad]
    *acc_ref : (8, Pt)   per-sublane-slot running accumulators (VMEM scratch)
    """
    f_idx = pl.program_id(2)
    pt = pix_ref.shape[1]

    @pl.when(f_idx == 0)
    def _init():
        zacc_ref[...] = jnp.full((8, pt), _BIG, jnp.float32)
        racc_ref[...] = jnp.zeros((8, pt), jnp.float32)
        gacc_ref[...] = jnp.zeros((8, pt), jnp.float32)
        bacc_ref[...] = jnp.zeros((8, pt), jnp.float32)

    # Pixel centers precomputed in glue (no int div/mod here); broadcast once
    # to full (8, Pt) vregs, hoisted out of the face loop.
    px = jnp.broadcast_to(pix_ref[0:1, :], (8, pt))
    py = jnp.broadcast_to(pix_ref[1:2, :], (8, pt))

    @pl.loop(0, groups)
    def _face_group(g):
        base = pl.multiple_of(g * 8, 8)

        def col(k):  # (8, 1) coefficient column for 8 faces (sublanes)
            return coef_ref[pl.ds(base, 8), k:k + 1]

        l0a, l0b, l0c = col(0), col(1), col(2)
        l1a, l1b, l1c = col(3), col(4), col(5)
        za, zb, zc = col(6), col(7), col(8)
        ra, rb, rc = col(9), col(10), col(11)
        ga, gb, gc = col(12), col(13), col(14)
        ba, bb, bc = col(15), col(16), col(17)

        # Barycentrics / depth as affine functions of (px, py); 1/area is
        # already folded into the coefficients -> no divides in the kernel.
        l0 = l0a * px + l0b * py + l0c
        l1 = l1a * px + l1b * py + l1c
        l2 = 1.0 - l0 - l1
        z = za * px + zb * py + zc
        inside = (l0 >= 0.0) & (l1 >= 0.0) & (l2 >= 0.0) & (z > 0.0)
        zcand = jnp.where(inside, z, _BIG)

        # Single-pass select-on-new-minimum into per-slot accumulators.
        zprev = zacc_ref[...]
        take = zcand < zprev
        zacc_ref[...] = jnp.where(take, zcand, zprev)
        racc_ref[...] = jnp.where(take, ra * px + rb * py + rc, racc_ref[...])
        gacc_ref[...] = jnp.where(take, ga * px + gb * py + gc, gacc_ref[...])
        bacc_ref[...] = jnp.where(take, ba * px + bb * py + bc, bacc_ref[...])

    @pl.when(f_idx == pl.num_programs(2) - 1)
    def _finalize():
        # 8 -> 1 min-with-payload reduction over sublane slots (once per tile).
        zmin = zacc_ref[0:1, :]
        rw = racc_ref[0:1, :]
        gw = gacc_ref[0:1, :]
        bw = bacc_ref[0:1, :]
        for s in range(1, 8):
            zs = zacc_ref[s:s + 1, :]
            t = zs < zmin
            zmin = jnp.where(t, zs, zmin)
            rw = jnp.where(t, racc_ref[s:s + 1, :], rw)
            gw = jnp.where(t, gacc_ref[s:s + 1, :], gw)
            bw = jnp.where(t, bacc_ref[s:s + 1, :], bw)
        hit = zmin < 0.5 * _BIG
        out_ref[0:1, :] = jnp.where(hit, rw, 0.0)
        out_ref[1:2, :] = jnp.where(hit, gw, 0.0)
        out_ref[2:3, :] = jnp.where(hit, bw, 0.0)
        out_ref[3:4, :] = jnp.where(hit, 1.0, 0.0)
        out_ref[4:5, :] = jnp.where(hit, zmin, -1.0)
        out_ref[5:8, :] = jnp.zeros((3, pt), jnp.float32)


class MeshRendererWithDepth:
    """forward(mesh) -> (images (B,H,W,4), zbuf (B,H,W,1)), like the nn.Module."""

    def __init__(self, image_size=(16, 16), focal=1.5, cam_z=3.0,
                 pixel_tile=2048, face_tile=256):
        self.H, self.W = image_size
        self.focal = focal
        self.cam_z = cam_z
        self.pixel_tile = pixel_tile   # lanes per grid step (multiple of 128)
        self.face_tile = face_tile     # faces per reduction step (multiple of 8)

    def _project(self, verts):
        # simple pinhole camera at (0,0,cam_z) looking down -z
        x, y, z = verts[..., 0], verts[..., 1], verts[..., 2]
        depth = self.cam_z - z                            # positive view depth
        x_ndc = self.focal * x / depth
        y_ndc = self.focal * y / depth
        px = (x_ndc * 0.5 + 0.5) * self.W
        py = (1.0 - (y_ndc * 0.5 + 0.5)) * self.H
        return jnp.stack([px, py, depth], axis=-1)        # (B, V, 3)

    def _face_coeffs(self, verts_screen, faces, verts_rgb):
        """Fold edge functions, 1/area and interpolation into 18 affine
        coefficients per face: l0, l1, z, r, g, b as a*px + b*py + c."""
        fv = jnp.take(verts_screen, faces, axis=1)        # (B, F, 3, 3)
        fc = jnp.take(verts_rgb, faces, axis=1)           # (B, F, 3, 3)
        x0, y0, z0 = fv[..., 0, 0], fv[..., 0, 1], fv[..., 0, 2]
        x1, y1, z1 = fv[..., 1, 0], fv[..., 1, 1], fv[..., 1, 2]
        x2, y2, z2 = fv[..., 2, 0], fv[..., 2, 1], fv[..., 2, 2]
        d01x, d01y = x1 - x0, y1 - y0
        d12x, d12y = x2 - x1, y2 - y1
        d20x, d20y = x0 - x2, y0 - y2
        area = d01x * (y2 - y0) - d01y * (x2 - x0)
        valid = jnp.abs(area) > 1e-8
        inv_area = jnp.where(valid, 1.0 / jnp.where(valid, area, 1.0), 0.0)
        # w0 = (px-x1)*d12y - (py-y1)*d12x  -> affine in (px, py); likewise w1.
        l0a = d12y * inv_area
        l0b = -d12x * inv_area
        l0c = (y1 * d12x - x1 * d12y) * inv_area
        l1a = d20y * inv_area
        l1b = -d20x * inv_area
        l1c = (y2 * d20x - x2 * d20y) * inv_area

        def plane(v0, v1, v2):   # v = l0*v0 + l1*v1 + (1-l0-l1)*v2, as a plane
            d0, d1 = v0 - v2, v1 - v2
            return (l0a * d0 + l1a * d1,
                    l0b * d0 + l1b * d1,
                    l0c * d0 + l1c * d1 + v2)

        za, zb, zc = plane(z0, z1, z2)
        ra, rb, rc = plane(fc[..., 0, 0], fc[..., 1, 0], fc[..., 2, 0])
        ga, gb, gc = plane(fc[..., 0, 1], fc[..., 1, 1], fc[..., 2, 1])
        ba, bb, bc = plane(fc[..., 0, 2], fc[..., 1, 2], fc[..., 2, 2])
        # Degenerate faces: force the inside test to fail (l0 = -1 < 0).
        l0c = jnp.where(valid, l0c, -1.0)
        return jnp.stack([l0a, l0b, l0c, l1a, l1b, l1c,
                          za, zb, zc, ra, rb, rc,
                          ga, gb, gc, ba, bb, bc], axis=-1)   # (B, F, 18)

    def __call__(self, verts_world, faces, verts_rgb):
        B = verts_world.shape[0]
        F = faces.shape[0]
        H, W = self.H, self.W
        HW = H * W

        # --- glue: project, gather, fold per-face math into plane coeffs ---
        verts_screen = self._project(verts_world.astype(jnp.float32))
        coef = self._face_coeffs(verts_screen, faces,
                                 verts_rgb.astype(jnp.float32))   # (B, F, 18)

        # --- tiling: pixels on lanes (parallel), faces on sublanes (reduce) ---
        pt = min(self.pixel_tile, _round_up(HW, 128))
        hw_pad = _round_up(HW, pt)
        ft = min(self.face_tile, _round_up(F, 8))
        f_pad = _round_up(F, ft)

        # zero-padded faces have z == 0 which fails the z > 0 inside test
        coef = jnp.pad(coef, ((0, 0), (0, f_pad - F), (0, 0)))

        # precomputed pixel centers (no div/mod in-kernel); padded pixels are
        # placed far outside every triangle and sliced away afterwards
        cols = (jnp.arange(HW, dtype=jnp.int32) % W).astype(jnp.float32) + 0.5
        rows = (jnp.arange(HW, dtype=jnp.int32) // W).astype(jnp.float32) + 0.5
        pix = jnp.stack([cols, rows], axis=0)                     # (2, HW)
        pix = jnp.pad(pix, ((0, 0), (0, hw_pad - HW)),
                      constant_values=-1e6)

        grid = (B, hw_pad // pt, f_pad // ft)
        kernel = functools.partial(_render_kernel, groups=ft // 8)

        out = pl.pallas_call(
            kernel,
            out_shape=jax.ShapeDtypeStruct((B, 8, hw_pad), jnp.float32),
            grid_spec=pltpu.PrefetchScalarGridSpec(
                num_scalar_prefetch=0,
                grid=grid,
                in_specs=[
                    # faces on sublanes, 18 coeffs on lanes (full last dim)
                    pl.BlockSpec((None, ft, 18), lambda b, p, f: (b, f, 0)),
                    # pixel-center x/y rows, pixels lane-dense
                    pl.BlockSpec((2, pt), lambda b, p, f: (0, p)),
                ],
                out_specs=pl.BlockSpec((None, 8, pt), lambda b, p, f: (b, 0, p)),
                scratch_shapes=[pltpu.VMEM((8, pt), jnp.float32)] * 4,
            ),
            compiler_params=pltpu.CompilerParams(
                dimension_semantics=("parallel", "parallel", "arbitrary"),
                vmem_limit_bytes=32 * 1024 * 1024),
        )(coef, pix)

        out = out[:, :, :HW].transpose(0, 2, 1).reshape(B, H, W, 8)
        images = out[..., 0:4]      # RGBA
        zbuf = out[..., 4:5]        # depth, -1 where no face
        return images, zbuf


if __name__ == "__main__":
    key = jax.random.PRNGKey(0)
    k1, k2, k3 = jax.random.split(key, 3)

    B, V, F, H, W = 2, 24, 16, 16, 16
    verts = jax.random.uniform(k1, (B, V, 3), jnp.float32, -0.8, 0.8)
    faces = jax.random.randint(k2, (F, 3), 0, V, jnp.int32)
    verts_rgb = jax.random.uniform(k3, (B, V, 3), jnp.float32, 0.0, 1.0)

    renderer = MeshRendererWithDepth(image_size=(H, W))
    images, zbuf = renderer(verts, faces, verts_rgb)
    jax.block_until_ready((images, zbuf))

    assert images.shape == (B, H, W, 4) and images.dtype == jnp.float32
    assert zbuf.shape == (B, H, W, 1) and zbuf.dtype == jnp.float32
    print("KERNEL_OK")
</pallas_src>

<mosaic_0001>
module attributes {stable_mosaic.version = 11 : i64} {
  func.func @_render_kernel(%arg0: i32, %arg1: i32, %arg2: i32, %arg3: memref<1x16x18xf32, #tpu.memory_space<vmem>>, %arg4: memref<2x256xf32, #tpu.memory_space<vmem>>, %arg5: memref<1x8x256xf32, #tpu.memory_space<vmem>>, %arg6: memref<8x256xf32, #tpu.memory_space<vmem>>, %arg7: memref<8x256xf32, #tpu.memory_space<vmem>>, %arg8: memref<8x256xf32, #tpu.memory_space<vmem>>, %arg9: memref<8x256xf32, #tpu.memory_space<vmem>>) attributes {dimension_semantics = [#tpu.dimension_semantics<parallel>, #tpu.dimension_semantics<parallel>, #tpu.dimension_semantics<arbitrary>], iteration_bounds = array<i64: 2, 1, 1>, scalar_prefetch = 0 : i64, scratch_operands = 4 : i64, tpu.core_type = #tpu.core_type<tc>, window_params = [{transform_indices = @transform_0, window_bounds = array<i64: 1, 16, 18>}, {transform_indices = @transform_1, window_bounds = array<i64: 2, 256>}, {transform_indices = @transform_2, window_bounds = array<i64: 1, 8, 256>}]} {
    %c0_i32 = arith.constant 0 : i32
    %0 = arith.cmpi eq, %arg2, %c0_i32 : i32
    %1 = arith.extui %0 : i1 to i32
    %c0_i32_0 = arith.constant 0 : i32
    %2 = arith.cmpi ne, %1, %c0_i32_0 : i32
    scf.if %2 {
      %cst = arith.constant 1.000000e+30 : f32
      %13 = vector.broadcast %cst : f32 to vector<8x256xf32>
      %c0_7 = arith.constant 0 : index
      %c0_8 = arith.constant 0 : index
      %14 = vector.load %arg6[%c0_7, %c0_8] : memref<8x256xf32, #tpu.memory_space<vmem>>, vector<8x256xf32>
      tpu.vector_store %arg6[%c0_7, %c0_8], %13 {strides = array<i32>} : memref<8x256xf32, #tpu.memory_space<vmem>>, vector<8x256xf32>,
      %cst_9 = arith.constant 0.000000e+00 : f32
      %15 = vector.broadcast %cst_9 : f32 to vector<8x256xf32>
      %c0_10 = arith.constant 0 : index
      %c0_11 = arith.constant 0 : index
      %16 = vector.load %arg7[%c0_10, %c0_11] : memref<8x256xf32, #tpu.memory_space<vmem>>, vector<8x256xf32>
      tpu.vector_store %arg7[%c0_10, %c0_11], %15 {strides = array<i32>} : memref<8x256xf32, #tpu.memory_space<vmem>>, vector<8x256xf32>,
      %cst_12 = arith.constant 0.000000e+00 : f32
      %17 = vector.broadcast %cst_12 : f32 to vector<8x256xf32>
      %c0_13 = arith.constant 0 : index
      %c0_14 = arith.constant 0 : index
      %18 = vector.load %arg8[%c0_13, %c0_14] : memref<8x256xf32, #tpu.memory_space<vmem>>, vector<8x256xf32>
      tpu.vector_store %arg8[%c0_13, %c0_14], %17 {strides = array<i32>} : memref<8x256xf32, #tpu.memory_space<vmem>>, vector<8x256xf32>,
      %cst_15 = arith.constant 0.000000e+00 : f32
      %19 = vector.broadcast %cst_15 : f32 to vector<8x256xf32>
      %c0_16 = arith.constant 0 : index
      %c0_17 = arith.constant 0 : index
      %20 = vector.load %arg9[%c0_16, %c0_17] : memref<8x256xf32, #tpu.memory_space<vmem>>, vector<8x256xf32>
      tpu.vector_store %arg9[%c0_16, %c0_17], %19 {strides = array<i32>} : memref<8x256xf32, #tpu.memory_space<vmem>>, vector<8x256xf32>,
    } else {
    }
    %c0 = arith.constant 0 : index
    %c0_1 = arith.constant 0 : index
    %3 = vector.load %arg4[%c0, %c0_1] : memref<2x256xf32, #tpu.memory_space<vmem>>, vector<1x256xf32>
    %4 = vector.shape_cast %3 : vector<1x256xf32> to vector<1x256xf32>
    %5 = vector.broadcast %4 : vector<1x256xf32> to vector<8x256xf32>
    %c1 = arith.constant 1 : index
    %c0_2 = arith.constant 0 : index
    %6 = vector.load %arg4[%c1, %c0_2] : memref<2x256xf32, #tpu.memory_space<vmem>>, vector<1x256xf32>
    %7 = vector.shape_cast %6 : vector<1x256xf32> to vector<1x256xf32>
    %8 = vector.broadcast %7 : vector<1x256xf32> to vector<8x256xf32>
    %c0_i32_3 = arith.constant 0 : i32
    %c2_i32 = arith.constant 2 : i32
    %9 = arith.addi %c0_i32_3, %c2_i32 : i32
    %c1_i32 = arith.constant 1 : i32
    scf.for %arg10 = %c0_i32_3 to %9 step %c1_i32  : i32 {
      %c1_i32_7 = arith.constant 1 : i32
      %13 = arith.muli %arg10, %c1_i32_7 : i32
      %c0_i32_8 = arith.constant 0 : i32
      %14 = arith.addi %c0_i32_8, %13 : i32
      %c8_i32 = arith.constant 8 : i32
      %15 = arith.muli %14, %c8_i32 : i32
      %16 = tpu.assume_multiple %15, 8 : i32
      %c0_9 = arith.constant 0 : index
      %17 = arith.index_cast %16 : i32 to index
      %c0_10 = arith.constant 0 : index
      %18 = vector.load %arg3[%c0_9, %17, %c0_10] : memref<1x16x18xf32, #tpu.memory_space<vmem>>, vector<1x8x1xf32>
      %19 = vector.shape_cast %18 : vector<1x8x1xf32> to vector<8x1xf32>
      %c0_11 = arith.constant 0 : index
      %20 = arith.index_cast %16 : i32 to index
      %c1_12 = arith.constant 1 : index
      %21 = vector.load %arg3[%c0_11, %20, %c1_12] : memref<1x16x18xf32, #tpu.memory_space<vmem>>, vector<1x8x1xf32>
      %22 = vector.shape_cast %21 : vector<1x8x1xf32> to vector<8x1xf32>
      %c0_13 = arith.constant 0 : index
      %23 = arith.index_cast %16 : i32 to index
      %c2 = arith.constant 2 : index
      %24 = vector.load %arg3[%c0_13, %23, %c2] : memref<1x16x18xf32, #tpu.memory_space<vmem>>, vector<1x8x1xf32>
      %25 = vector.shape_cast %24 : vector<1x8x1xf32> to vector<8x1xf32>
      %c0_14 = arith.constant 0 : index
      %26 = arith.index_cast %16 : i32 to index
      %c3 = arith.constant 3 : index
      %27 = vector.load %arg3[%c0_14, %26, %c3] : memref<1x16x18xf32, #tpu.memory_space<vmem>>, vector<1x8x1xf32>
      %28 = vector.shape_cast %27 : vector<1x8x1xf32> to vector<8x1xf32>
      %c0_15 = arith.constant 0 : index
      %29 = arith.index_cast %16 : i32 to index
      %c4 = arith.constant 4 : index
      %30 = vector.load %arg3[%c0_15, %29, %c4] : memref<1x16x18xf32, #tpu.memory_space<vmem>>, vector<1x8x1xf32>
      %31 = vector.shape_cast %30 : vector<1x8x1xf32> to vector<8x1xf32>
      %c0_16 = arith.constant 0 : index
      %32 = arith.index_cast %16 : i32 to index
      %c5 = arith.constant 5 : index
      %33 = vector.load %arg3[%c0_16, %32, %c5] : memref<1x16x18xf32, #tpu.memory_space<vmem>>, vector<1x8x1xf32>
      %34 = vector.shape_cast %33 : vector<1x8x1xf32> to vector<8x1xf32>
      %c0_17 = arith.constant 0 : index
      %35 = arith.index_cast %16 : i32 to index
      %c6 = arith.constant 6 : index
      %36 = vector.load %arg3[%c0_17, %35, %c6] : memref<1x16x18xf32, #tpu.memory_space<vmem>>, vector<1x8x1xf32>
      %37 = vector.shape_cast %36 : vector<1x8x1xf32> to vector<8x1xf32>
      %c0_18 = arith.constant 0 : index
      %38 = arith.index_cast %16 : i32 to index
      %c7 = arith.constant 7 : index
      %39 = vector.load %arg3[%c0_18, %38, %c7] : memref<1x16x18xf32, #tpu.memory_space<vmem>>, vector<1x8x1xf32>
      %40 = vector.shape_cast %39 : vector<1x8x1xf32> to vector<8x1xf32>
      %c0_19 = arith.constant 0 : index
      %41 = arith.index_cast %16 : i32 to index
      %c8 = arith.constant 8 : index
      %42 = vector.load %arg3[%c0_19, %41, %c8] : memref<1x16x18xf32, #tpu.memory_space<vmem>>, vector<1x8x1xf32>
      %43 = vector.shape_cast %42 : vector<1x8x1xf32> to vector<8x1xf32>
      %c0_20 = arith.constant 0 : index
      %44 = arith.index_cast %16 : i32 to index
      %c9 = arith.constant 9 : index
      %45 = vector.load %arg3[%c0_20, %44, %c9] : memref<1x16x18xf32, #tpu.memory_space<vmem>>, vector<1x8x1xf32>
      %46 = vector.shape_cast %45 : vector<1x8x1xf32> to vector<8x1xf32>
      %c0_21 = arith.constant 0 : index
      %47 = arith.index_cast %16 : i32 to index
      %c10 = arith.constant 10 : index
      %48 = vector.load %arg3[%c0_21, %47, %c10] : memref<1x16x18xf32, #tpu.memory_space<vmem>>, vector<1x8x1xf32>
      %49 = vector.shape_cast %48 : vector<1x8x1xf32> to vector<8x1xf32>
      %c0_22 = arith.constant 0 : index
      %50 = arith.index_cast %16 : i32 to index
      %c11 = arith.constant 11 : index
      %51 = vector.load %arg3[%c0_22, %50, %c11] : memref<1x16x18xf32, #tpu.memory_space<vmem>>, vector<1x8x1xf32>
      %52 = vector.shape_cast %51 : vector<1x8x1xf32> to vector<8x1xf32>
      %c0_23 = arith.constant 0 : index
      %53 = arith.index_cast %16 : i32 to index
      %c12 = arith.constant 12 : index
      %54 = vector.load %arg3[%c0_23, %53, %c12] : memref<1x16x18xf32, #tpu.memory_space<vmem>>, vector<1x8x1xf32>
      %55 = vector.shape_cast %54 : vector<1x8x1xf32> to vector<8x1xf32>
      %c0_24 = arith.constant 0 : index
      %56 = arith.index_cast %16 : i32 to index
      %c13 = arith.constant 13 : index
      %57 = vector.load %arg3[%c0_24, %56, %c13] : memref<1x16x18xf32, #tpu.memory_space<vmem>>, vector<1x8x1xf32>
      %58 = vector.shape_cast %57 : vector<1x8x1xf32> to vector<8x1xf32>
      %c0_25 = arith.constant 0 : index
      %59 = arith.index_cast %16 : i32 to index
      %c14 = arith.constant 14 : index
      %60 = vector.load %arg3[%c0_25, %59, %c14] : memref<1x16x18xf32, #tpu.memory_space<vmem>>, vector<1x8x1xf32>
      %61 = vector.shape_cast %60 : vector<1x8x1xf32> to vector<8x1xf32>
      %c0_26 = arith.constant 0 : index
      %62 = arith.index_cast %16 : i32 to index
      %c15 = arith.constant 15 : index
      %63 = vector.load %arg3[%c0_26, %62, %c15] : memref<1x16x18xf32, #tpu.memory_space<vmem>>, vector<1x8x1xf32>
      %64 = vector.shape_cast %63 : vector<1x8x1xf32> to vector<8x1xf32>
      %c0_27 = arith.constant 0 : index
      %65 = arith.index_cast %16 : i32 to index
      %c16 = arith.constant 16 : index
      %66 = vector.load %arg3[%c0_27, %65, %c16] : memref<1x16x18xf32, #tpu.memory_space<vmem>>, vector<1x8x1xf32>
      %67 = vector.shape_cast %66 : vector<1x8x1xf32> to vector<8x1xf32>
      %c0_28 = arith.constant 0 : index
      %68 = arith.index_cast %16 : i32 to index
      %c17 = arith.constant 17 : index
      %69 = vector.load %arg3[%c0_28, %68, %c17] : memref<1x16x18xf32, #tpu.memory_space<vmem>>, vector<1x8x1xf32>
      %70 = vector.shape_cast %69 : vector<1x8x1xf32> to vector<8x1xf32>
      %71 = vector.broadcast %19 : vector<8x1xf32> to vector<8x256xf32>
      %72 = arith.mulf %71, %5 : vector<8x256xf32>
      %73 = vector.broadcast %22 : vector<8x1xf32> to vector<8x256xf32>
      %74 = arith.mulf %73, %8 : vector<8x256xf32>
      %75 = arith.addf %72, %74 : vector<8x256xf32>
      %76 = vector.broadcast %25 : vector<8x1xf32> to vector<8x256xf32>
      %77 = arith.addf %75, %76 : vector<8x256xf32>
      %78 = vector.broadcast %28 : vector<8x1xf32> to vector<8x256xf32>
      %79 = arith.mulf %78, %5 : vector<8x256xf32>
      %80 = vector.broadcast %31 : vector<8x1xf32> to vector<8x256xf32>
      %81 = arith.mulf %80, %8 : vector<8x256xf32>
      %82 = arith.addf %79, %81 : vector<8x256xf32>
      %83 = vector.broadcast %34 : vector<8x1xf32> to vector<8x256xf32>
      %84 = arith.addf %82, %83 : vector<8x256xf32>
      %cst = arith.constant 1.000000e+00 : f32
      %85 = vector.broadcast %cst : f32 to vector<8x256xf32>
      %86 = arith.subf %85, %77 : vector<8x256xf32>
      %87 = arith.subf %86, %84 : vector<8x256xf32>
      %88 = vector.broadcast %37 : vector<8x1xf32> to vector<8x256xf32>
      %89 = arith.mulf %88, %5 : vector<8x256xf32>
      %90 = vector.broadcast %40 : vector<8x1xf32> to vector<8x256xf32>
      %91 = arith.mulf %90, %8 : vector<8x256xf32>
      %92 = arith.addf %89, %91 : vector<8x256xf32>
      %93 = vector.broadcast %43 : vector<8x1xf32> to vector<8x256xf32>
      %94 = arith.addf %92, %93 : vector<8x256xf32>
      %cst_29 = arith.constant 0.000000e+00 : f32
      %95 = vector.broadcast %cst_29 : f32 to vector<8x256xf32>
      %96 = arith.cmpf oge, %77, %95 : vector<8x256xf32>
      %cst_30 = arith.constant 0.000000e+00 : f32
      %97 = vector.broadcast %cst_30 : f32 to vector<8x256xf32>
      %98 = arith.cmpf oge, %84, %97 : vector<8x256xf32>
      %99 = arith.andi %96, %98 : vector<8x256xi1>
      %cst_31 = arith.constant 0.000000e+00 : f32
      %100 = vector.broadcast %cst_31 : f32 to vector<8x256xf32>
      %101 = arith.cmpf oge, %87, %100 : vector<8x256xf32>
      %102 = arith.andi %99, %101 : vector<8x256xi1>
      %cst_32 = arith.constant 0.000000e+00 : f32
      %103 = vector.broadcast %cst_32 : f32 to vector<8x256xf32>
      %104 = arith.cmpf ogt, %94, %103 : vector<8x256xf32>
      %105 = arith.andi %102, %104 : vector<8x256xi1>
      %cst_33 = arith.constant 1.000000e+30 : f32
      %106 = vector.broadcast %cst_33 : f32 to vector<8x256xf32>
      %107 = arith.select %105, %94, %106 : vector<8x256xi1>, vector<8x256xf32>
      %c0_34 = arith.constant 0 : index
      %c0_35 = arith.constant 0 : index
      %108 = vector.load %arg6[%c0_34, %c0_35] : memref<8x256xf32, #tpu.memory_space<vmem>>, vector<8x256xf32>
      %109 = arith.cmpf olt, %107, %108 : vector<8x256xf32>
      %110 = arith.select %109, %107, %108 : vector<8x256xi1>, vector<8x256xf32>
      %c0_36 = arith.constant 0 : index
      %c0_37 = arith.constant 0 : index
      %111 = vector.load %arg6[%c0_36, %c0_37] : memref<8x256xf32, #tpu.memory_space<vmem>>, vector<8x256xf32>
      tpu.vector_store %arg6[%c0_36, %c0_37], %110 {strides = array<i32>} : memref<8x256xf32, #tpu.memory_space<vmem>>, vector<8x256xf32>,
      %112 = vector.broadcast %46 : vector<8x1xf32> to vector<8x256xf32>
      %113 = arith.mulf %112, %5 : vector<8x256xf32>
      %114 = vector.broadcast %49 : vector<8x1xf32> to vector<8x256xf32>
      %115 = arith.mulf %114, %8 : vector<8x256xf32>
      %116 = arith.addf %113, %115 : vector<8x256xf32>
      %117 = vector.broadcast %52 : vector<8x1xf32> to vector<8x256xf32>
      %118 = arith.addf %116, %117 : vector<8x256xf32>
      %c0_38 = arith.constant 0 : index
      %c0_39 = arith.constant 0 : index
      %119 = vector.load %arg7[%c0_38, %c0_39] : memref<8x256xf32, #tpu.memory_space<vmem>>, vector<8x256xf32>
      %120 = arith.select %109, %118, %119 : vector<8x256xi1>, vector<8x256xf32>
      %c0_40 = arith.constant 0 : index
      %c0_41 = arith.constant 0 : index
      %121 = vector.load %arg7[%c0_40, %c0_41] : memref<8x256xf32, #tpu.memory_space<vmem>>, vector<8x256xf32>
      tpu.vector_store %arg7[%c0_40, %c0_41], %120 {strides = array<i32>} : memref<8x256xf32, #tpu.memory_space<vmem>>, vector<8x256xf32>,
      %122 = vector.broadcast %55 : vector<8x1xf32> to vector<8x256xf32>
      %123 = arith.mulf %122, %5 : vector<8x256xf32>
      %124 = vector.broadcast %58 : vector<8x1xf32> to vector<8x256xf32>
      %125 = arith.mulf %124, %8 : vector<8x256xf32>
      %126 = arith.addf %123, %125 : vector<8x256xf32>
      %127 = vector.broadcast %61 : vector<8x1xf32> to vector<8x256xf32>
      %128 = arith.addf %126, %127 : vector<8x256xf32>
      %c0_42 = arith.constant 0 : index
      %c0_43 = arith.constant 0 : index
      %129 = vector.load %arg8[%c0_42, %c0_43] : memref<8x256xf32, #tpu.memory_space<vmem>>, vector<8x256xf32>
      %130 = arith.select %109, %128, %129 : vector<8x256xi1>, vector<8x256xf32>
      %c0_44 = arith.constant 0 : index
      %c0_45 = arith.constant 0 : index
      %131 = vector.load %arg8[%c0_44, %c0_45] : memref<8x256xf32, #tpu.memory_space<vmem>>, vector<8x256xf32>
      tpu.vector_store %arg8[%c0_44, %c0_45], %130 {strides = array<i32>} : memref<8x256xf32, #tpu.memory_space<vmem>>, vector<8x256xf32>,
      %132 = vector.broadcast %64 : vector<8x1xf32> to vector<8x256xf32>
      %133 = arith.mulf %132, %5 : vector<8x256xf32>
      %134 = vector.broadcast %67 : vector<8x1xf32> to vector<8x256xf32>
      %135 = arith.mulf %134, %8 : vector<8x256xf32>
      %136 = arith.addf %133, %135 : vector<8x256xf32>
      %137 = vector.broadcast %70 : vector<8x1xf32> to vector<8x256xf32>
      %138 = arith.addf %136, %137 : vector<8x256xf32>
      %c0_46 = arith.constant 0 : index
      %c0_47 = arith.constant 0 : index
      %139 = vector.load %arg9[%c0_46, %c0_47] : memref<8x256xf32, #tpu.memory_space<vmem>>, vector<8x256xf32>
      %140 = arith.select %109, %138, %139 : vector<8x256xi1>, vector<8x256xf32>
      %c0_48 = arith.constant 0 : index
      %c0_49 = arith.constant 0 : index
      %141 = vector.load %arg9[%c0_48, %c0_49] : memref<8x256xf32, #tpu.memory_space<vmem>>, vector<8x256xf32>
      tpu.vector_store %arg9[%c0_48, %c0_49], %140 {strides = array<i32>} : memref<8x256xf32, #tpu.memory_space<vmem>>, vector<8x256xf32>,
    }
    %c2_i32_4 = arith.constant 2 : i32
    %c0_i32_5 = arith.constant 0 : i32
    %10 = arith.cmpi eq, %arg2, %c0_i32_5 : i32
    %11 = arith.extui %10 : i1 to i32
    %c0_i32_6 = arith.constant 0 : i32
    %12 = arith.cmpi ne, %11, %c0_i32_6 : i32
    scf.if %12 {
      %c0_7 = arith.constant 0 : index
      %c0_8 = arith.constant 0 : index
      %13 = vector.load %arg6[%c0_7, %c0_8] : memref<8x256xf32, #tpu.memory_space<vmem>>, vector<1x256xf32>
      %c0_9 = arith.constant 0 : index
      %c0_10 = arith.constant 0 : index
      %14 = vector.load %arg7[%c0_9, %c0_10] : memref<8x256xf32, #tpu.memory_space<vmem>>, vector<1x256xf32>
      %c0_11 = arith.constant 0 : index
      %c0_12 = arith.constant 0 : index
      %15 = vector.load %arg8[%c0_11, %c0_12] : memref<8x256xf32, #tpu.memory_space<vmem>>, vector<1x256xf32>
      %c0_13 = arith.constant 0 : index
      %c0_14 = arith.constant 0 : index
      %16 = vector.load %arg9[%c0_13, %c0_14] : memref<8x256xf32, #tpu.memory_space<vmem>>, vector<1x256xf32>
      %c1_15 = arith.constant 1 : index
      %c0_16 = arith.constant 0 : index
      %17 = vector.load %arg6[%c1_15, %c0_16] : memref<8x256xf32, #tpu.memory_space<vmem>>, vector<1x256xf32>
      %18 = arith.cmpf olt, %17, %13 : vector<1x256xf32>
      %19 = arith.select %18, %17, %13 : vector<1x256xi1>, vector<1x256xf32>
      %c1_17 = arith.constant 1 : index
      %c0_18 = arith.constant 0 : index
      %20 = vector.load %arg7[%c1_17, %c0_18] : memref<8x256xf32, #tpu.memory_space<vmem>>, vector<1x256xf32>
      %21 = arith.select %18, %20, %14 : vector<1x256xi1>, vector<1x256xf32>
      %c1_19 = arith.constant 1 : index
      %c0_20 = arith.constant 0 : index
      %22 = vector.load %arg8[%c1_19, %c0_20] : memref<8x256xf32, #tpu.memory_space<vmem>>, vector<1x256xf32>
      %23 = arith.select %18, %22, %15 : vector<1x256xi1>, vector<1x256xf32>
      %c1_21 = arith.constant 1 : index
      %c0_22 = arith.constant 0 : index
      %24 = vector.load %arg9[%c1_21, %c0_22] : memref<8x256xf32, #tpu.memory_space<vmem>>, vector<1x256xf32>
      %25 = arith.select %18, %24, %16 : vector<1x256xi1>, vector<1x256xf32>
      %c2 = arith.constant 2 : index
      %c0_23 = arith.constant 0 : index
      %26 = vector.load %arg6[%c2, %c0_23] : memref<8x256xf32, #tpu.memory_space<vmem>>, vector<1x256xf32>
      %27 = arith.cmpf olt, %26, %19 : vector<1x256xf32>
      %28 = arith.select %27, %26, %19 : vector<1x256xi1>, vector<1x256xf32>
      %c2_24 = arith.constant 2 : index
      %c0_25 = arith.constant 0 : index
      %29 = vector.load %arg7[%c2_24, %c0_25] : memref<8x256xf32, #tpu.memory_space<vmem>>, vector<1x256xf32>
      %30 = arith.select %27, %29, %21 : vector<1x256xi1>, vector<1x256xf32>
      %c2_26 = arith.constant 2 : index
      %c0_27 = arith.constant 0 : index
      %31 = vector.load %arg8[%c2_26, %c0_27] : memref<8x256xf32, #tpu.memory_space<vmem>>, vector<1x256xf32>
      %32 = arith.select %27, %31, %23 : vector<1x256xi1>, vector<1x256xf32>
      %c2_28 = arith.constant 2 : index
      %c0_29 = arith.constant 0 : index
      %33 = vector.load %arg9[%c2_28, %c0_29] : memref<8x256xf32, #tpu.memory_space<vmem>>, vector<1x256xf32>
      %34 = arith.select %27, %33, %25 : vector<1x256xi1>, vector<1x256xf32>
      %c3 = arith.constant 3 : index
      %c0_30 = arith.constant 0 : index
      %35 = vector.load %arg6[%c3, %c0_30] : memref<8x256xf32, #tpu.memory_space<vmem>>, vector<1x256xf32>
      %36 = arith.cmpf olt, %35, %28 : vector<1x256xf32>
      %37 = arith.select %36, %35, %28 : vector<1x256xi1>, vector<1x256xf32>
      %c3_31 = arith.constant 3 : index
      %c0_32 = arith.constant 0 : index
      %38 = vector.load %arg7[%c3_31, %c0_32] : memref<8x256xf32, #tpu.memory_space<vmem>>, vector<1x256xf32>
      %39 = arith.select %36, %38, %30 : vector<1x256xi1>, vector<1x256xf32>
      %c3_33 = arith.constant 3 : index
      %c0_34 = arith.constant 0 : index
      %40 = vector.load %arg8[%c3_33, %c0_34] : memref<8x256xf32, #tpu.memory_space<vmem>>, vector<1x256xf32>
      %41 = arith.select %36, %40, %32 : vector<1x256xi1>, vector<1x256xf32>
      %c3_35 = arith.constant 3 : index
      %c0_36 = arith.constant 0 : index
      %42 = vector.load %arg9[%c3_35, %c0_36] : memref<8x256xf32, #tpu.memory_space<vmem>>, vector<1x256xf32>
      %43 = arith.select %36, %42, %34 : vector<1x256xi1>, vector<1x256xf32>
      %c4 = arith.constant 4 : index
      %c0_37 = arith.constant 0 : index
      %44 = vector.load %arg6[%c4, %c0_37] : memref<8x256xf32, #tpu.memory_space<vmem>>, vector<1x256xf32>
      %45 = arith.cmpf olt, %44, %37 : vector<1x256xf32>
      %46 = arith.select %45, %44, %37 : vector<1x256xi1>, vector<1x256xf32>
      %c4_38 = arith.constant 4 : index
      %c0_39 = arith.constant 0 : index
      %47 = vector.load %arg7[%c4_38, %c0_39] : memref<8x256xf32, #tpu.memory_space<vmem>>, vector<1x256xf32>
      %48 = arith.select %45, %47, %39 : vector<1x256xi1>, vector<1x256xf32>
      %c4_40 = arith.constant 4 : index
      %c0_41 = arith.constant 0 : index
      %49 = vector.load %arg8[%c4_40, %c0_41] : memref<8x256xf32, #tpu.memory_space<vmem>>, vector<1x256xf32>
      %50 = arith.select %45, %49, %41 : vector<1x256xi1>, vector<1x256xf32>
      %c4_42 = arith.constant 4 : index
      %c0_43 = arith.constant 0 : index
      %51 = vector.load %arg9[%c4_42, %c0_43] : memref<8x256xf32, #tpu.memory_space<vmem>>, vector<1x256xf32>
      %52 = arith.select %45, %51, %43 : vector<1x256xi1>, vector<1x256xf32>
      %c5 = arith.constant 5 : index
      %c0_44 = arith.constant 0 : index
      %53 = vector.load %arg6[%c5, %c0_44] : memref<8x256xf32, #tpu.memory_space<vmem>>, vector<1x256xf32>
      %54 = arith.cmpf olt, %53, %46 : vector<1x256xf32>
      %55 = arith.select %54, %53, %46 : vector<1x256xi1>, vector<1x256xf32>
      %c5_45 = arith.constant 5 : index
      %c0_46 = arith.constant 0 : index
      %56 = vector.load %arg7[%c5_45, %c0_46] : memref<8x256xf32, #tpu.memory_space<vmem>>, vector<1x256xf32>
      %57 = arith.select %54, %56, %48 : vector<1x256xi1>, vector<1x256xf32>
      %c5_47 = arith.constant 5 : index
      %c0_48 = arith.constant 0 : index
      %58 = vector.load %arg8[%c5_47, %c0_48] : memref<8x256xf32, #tpu.memory_space<vmem>>, vector<1x256xf32>
      %59 = arith.select %54, %58, %50 : vector<1x256xi1>, vector<1x256xf32>
      %c5_49 = arith.constant 5 : index
      %c0_50 = arith.constant 0 : index
      %60 = vector.load %arg9[%c5_49, %c0_50] : memref<8x256xf32, #tpu.memory_space<vmem>>, vector<1x256xf32>
      %61 = arith.select %54, %60, %52 : vector<1x256xi1>, vector<1x256xf32>
      %c6 = arith.constant 6 : index
      %c0_51 = arith.constant 0 : index
      %62 = vector.load %arg6[%c6, %c0_51] : memref<8x256xf32, #tpu.memory_space<vmem>>, vector<1x256xf32>
      %63 = arith.cmpf olt, %62, %55 : vector<1x256xf32>
      %64 = arith.select %63, %62, %55 : vector<1x256xi1>, vector<1x256xf32>
      %c6_52 = arith.constant 6 : index
      %c0_53 = arith.constant 0 : index
      %65 = vector.load %arg7[%c6_52, %c0_53] : memref<8x256xf32, #tpu.memory_space<vmem>>, vector<1x256xf32>
      %66 = arith.select %63, %65, %57 : vector<1x256xi1>, vector<1x256xf32>
      %c6_54 = arith.constant 6 : index
      %c0_55 = arith.constant 0 : index
      %67 = vector.load %arg8[%c6_54, %c0_55] : memref<8x256xf32, #tpu.memory_space<vmem>>, vector<1x256xf32>
      %68 = arith.select %63, %67, %59 : vector<1x256xi1>, vector<1x256xf32>
      %c6_56 = arith.constant 6 : index
      %c0_57 = arith.constant 0 : index
      %69 = vector.load %arg9[%c6_56, %c0_57] : memref<8x256xf32, #tpu.memory_space<vmem>>, vector<1x256xf32>
      %70 = arith.select %63, %69, %61 : vector<1x256xi1>, vector<1x256xf32>
      %c7 = arith.constant 7 : index
      %c0_58 = arith.constant 0 : index
      %71 = vector.load %arg6[%c7, %c0_58] : memref<8x256xf32, #tpu.memory_space<vmem>>, vector<1x256xf32>
      %72 = arith.cmpf olt, %71, %64 : vector<1x256xf32>
      %73 = arith.select %72, %71, %64 : vector<1x256xi1>, vector<1x256xf32>
      %c7_59 = arith.constant 7 : index
      %c0_60 = arith.constant 0 : index
      %74 = vector.load %arg7[%c7_59, %c0_60] : memref<8x256xf32, #tpu.memory_space<vmem>>, vector<1x256xf32>
      %75 = arith.select %72, %74, %66 : vector<1x256xi1>, vector<1x256xf32>
      %c7_61 = arith.constant 7 : index
      %c0_62 = arith.constant 0 : index
      %76 = vector.load %arg8[%c7_61, %c0_62] : memref<8x256xf32, #tpu.memory_space<vmem>>, vector<1x256xf32>
      %77 = arith.select %72, %76, %68 : vector<1x256xi1>, vector<1x256xf32>
      %c7_63 = arith.constant 7 : index
      %c0_64 = arith.constant 0 : index
      %78 = vector.load %arg9[%c7_63, %c0_64] : memref<8x256xf32, #tpu.memory_space<vmem>>, vector<1x256xf32>
      %79 = arith.select %72, %78, %70 : vector<1x256xi1>, vector<1x256xf32>
      %cst = arith.constant 5.000000e+29 : f32
      %80 = vector.broadcast %cst : f32 to vector<1x256xf32>
      %81 = arith.cmpf olt, %73, %80 : vector<1x256xf32>
      %cst_65 = arith.constant 0.000000e+00 : f32
      %82 = vector.broadcast %cst_65 : f32 to vector<1x256xf32>
      %83 = arith.select %81, %75, %82 : vector<1x256xi1>, vector<1x256xf32>
      %c0_66 = arith.constant 0 : index
      %c0_67 = arith.constant 0 : index
      %c0_68 = arith.constant 0 : index
      %84 = vector.load %arg5[%c0_66, %c0_67, %c0_68] : memref<1x8x256xf32, #tpu.memory_space<vmem>>, vector<1x1x256xf32>
      %85 = vector.shape_cast %84 : vector<1x1x256xf32> to vector<1x256xf32>
      %86 = vector.shape_cast %83 : vector<1x256xf32> to vector<1x1x256xf32>
      tpu.vector_store %arg5[%c0_66, %c0_67, %c0_68], %86 {strides = array<i32>} : memref<1x8x256xf32, #tpu.memory_space<vmem>>, vector<1x1x256xf32>,
      %cst_69 = arith.constant 0.000000e+00 : f32
      %87 = vector.broadcast %cst_69 : f32 to vector<1x256xf32>
      %88 = arith.select %81, %77, %87 : vector<1x256xi1>, vector<1x256xf32>
      %c0_70 = arith.constant 0 : index
      %c1_71 = arith.constant 1 : index
      %c0_72 = arith.constant 0 : index
      %89 = vector.load %arg5[%c0_70, %c1_71, %c0_72] : memref<1x8x256xf32, #tpu.memory_space<vmem>>, vector<1x1x256xf32>
      %90 = vector.shape_cast %89 : vector<1x1x256xf32> to vector<1x256xf32>
      %91 = vector.shape_cast %88 : vector<1x256xf32> to vector<1x1x256xf32>
      tpu.vector_store %arg5[%c0_70, %c1_71, %c0_72], %91 {strides = array<i32>} : memref<1x8x256xf32, #tpu.memory_space<vmem>>, vector<1x1x256xf32>,
      %cst_73 = arith.constant 0.000000e+00 : f32
      %92 = vector.broadcast %cst_73 : f32 to vector<1x256xf32>
      %93 = arith.select %81, %79, %92 : vector<1x256xi1>, vector<1x256xf32>
      %c0_74 = arith.constant 0 : index
      %c2_75 = arith.constant 2 : index
      %c0_76 = arith.constant 0 : index
      %94 = vector.load %arg5[%c0_74, %c2_75, %c0_76] : memref<1x8x256xf32, #tpu.memory_space<vmem>>, vector<1x1x256xf32>
      %95 = vector.shape_cast %94 : vector<1x1x256xf32> to vector<1x256xf32>
      %96 = vector.shape_cast %93 : vector<1x256xf32> to vector<1x1x256xf32>
      tpu.vector_store %arg5[%c0_74, %c2_75, %c0_76], %96 {strides = array<i32>} : memref<1x8x256xf32, #tpu.memory_space<vmem>>, vector<1x1x256xf32>,
      %cst_77 = arith.constant 1.000000e+00 : f32
      %cst_78 = arith.constant 0.000000e+00 : f32
      %97 = vector.broadcast %cst_77 : f32 to vector<1x256xf32>
      %98 = vector.broadcast %cst_78 : f32 to vector<1x256xf32>
      %99 = arith.select %81, %97, %98 : vector<1x256xi1>, vector<1x256xf32>
      %c0_79 = arith.constant 0 : index
      %c3_80 = arith.constant 3 : index
      %c0_81 = arith.constant 0 : index
      %100 = vector.load %arg5[%c0_79, %c3_80, %c0_81] : memref<1x8x256xf32, #tpu.memory_space<vmem>>, vector<1x1x256xf32>
      %101 = vector.shape_cast %100 : vector<1x1x256xf32> to vector<1x256xf32>
      %102 = vector.shape_cast %99 : vector<1x256xf32> to vector<1x1x256xf32>
      tpu.vector_store %arg5[%c0_79, %c3_80, %c0_81], %102 {strides = array<i32>} : memref<1x8x256xf32, #tpu.memory_space<vmem>>, vector<1x1x256xf32>,
      %cst_82 = arith.constant -1.000000e+00 : f32
      %103 = vector.broadcast %cst_82 : f32 to vector<1x256xf32>
      %104 = arith.select %81, %73, %103 : vector<1x256xi1>, vector<1x256xf32>
      %c0_83 = arith.constant 0 : index
      %c4_84 = arith.constant 4 : index
      %c0_85 = arith.constant 0 : index
      %105 = vector.load %arg5[%c0_83, %c4_84, %c0_85] : memref<1x8x256xf32, #tpu.memory_space<vmem>>, vector<1x1x256xf32>
      %106 = vector.shape_cast %105 : vector<1x1x256xf32> to vector<1x256xf32>
      %107 = vector.shape_cast %104 : vector<1x256xf32> to vector<1x1x256xf32>
      tpu.vector_store %arg5[%c0_83, %c4_84, %c0_85], %107 {strides = array<i32>} : memref<1x8x256xf32, #tpu.memory_space<vmem>>, vector<1x1x256xf32>,
      %cst_86 = arith.constant 0.000000e+00 : f32
      %108 = vector.broadcast %cst_86 : f32 to vector<3x256xf32>
      %c0_87 = arith.constant 0 : index
      %c5_88 = arith.constant 5 : index
      %c0_89 = arith.constant 0 : index
      %109 = vector.load %arg5[%c0_87, %c5_88, %c0_89] : memref<1x8x256xf32, #tpu.memory_space<vmem>>, vector<1x3x256xf32>
      %110 = vector.shape_cast %109 : vector<1x3x256xf32> to vector<3x256xf32>
      %111 = vector.shape_cast %108 : vector<3x256xf32> to vector<1x3x256xf32>
      tpu.vector_store %arg5[%c0_87, %c5_88, %c0_89], %111 {strides = array<i32>} : memref<1x8x256xf32, #tpu.memory_space<vmem>>, vector<1x3x256xf32>,
    } else {
    }
    return
  }
  func.func @transform_0(%arg0: i32, %arg1: i32, %arg2: i32) -> (i32, i32, i32) {
    %c0_i32 = arith.constant 0 : i32
    %c0_i32_0 = arith.constant 0 : i32
    return %arg0, %arg2, %c0_i32 : i32, i32, i32
  }
  func.func @transform_1(%arg0: i32, %arg1: i32, %arg2: i32) -> (i32, i32) {
    %c0_i32 = arith.constant 0 : i32
    %c0_i32_0 = arith.constant 0 : i32
    return %c0_i32, %arg1 : i32, i32
  }
  func.func @transform_2(%arg0: i32, %arg1: i32, %arg2: i32) -> (i32, i32, i32) {
    %c0_i32 = arith.constant 0 : i32
    %c0_i32_0 = arith.constant 0 : i32
    return %arg0, %c0_i32, %arg1 : i32, i32, i32
  }
}

</mosaic_0001>

<llo_original>
// kernel: tpu_custom_call.1
$region0: #{tpu_custom_call.1}
  #allocation0 [shape = 'u32[]', space=smem, size = 0x4, offset = 0x4, fixed_abs, tag = 'smem constant byte address 0x4 - core index']
  #allocation1 [shape = 'u32[144,128]{1,0:T(1,128)}', space=vmem, size = 0x12000, scoped, tag = 'internal scratch']
  #allocation2 [shape = 'f32[8,256]{1,0:T(8,128)}', space=vmem, size = 0x2000, scoped, tag = 'scratch operand']
  #allocation3 [shape = 'f32[8,256]{1,0:T(8,128)}', space=vmem, size = 0x2000, scoped, tag = 'scratch operand']
  #allocation4 [shape = 'f32[8,256]{1,0:T(8,128)}', space=vmem, size = 0x2000, scoped, tag = 'scratch operand']
  #allocation5 [shape = 'f32[8,256]{1,0:T(8,128)}', space=vmem, size = 0x2000, scoped, tag = 'scratch operand']
  %s0 = inlined_call_operand.hbm [shape: f32[2,16,18], index: 0, kind: input, shape index: {}]
  %s1 = inlined_call_operand.hbm [shape: f32[2,256], index: 1, kind: input, shape index: {}]
  %s2 = inlined_call_operand.hbm [shape: f32[2,8,256], index: 2, kind: output, shape index: {}]
  %s3 = sld [smem:[#allocation0]]
  $region64: #{tpu_custom_call.1} parent=0
    _
  %s5 = ssub.s32 1, %s3
  %s6 = scalar_select 0, %s5, %s3
  $region1: #{tpu_custom_call.1} parent=0
    #allocation6 [shape = 'u8[16384]{0}', space=vmem, size = 0x4000, scoped, tag = 'input window, operand 0']
    #allocation7 [shape = 's32[2]{0}', space=sflag, size = 0x8, scoped, tag = 'scoped memory for tpu_custom_call.1']
    #allocation8 [shape = 's32[2]{0}', space=sflag, size = 0x8, scoped, tag = 'scoped memory for tpu_custom_call.1']
    #allocation9 [shape = 'u8[2048]{0}', space=vmem, size = 0x800, scoped, tag = 'input window, operand 1, single buffered']
    #allocation10 [shape = 's32[1]{0}', space=sflag, size = 0x4, scoped, tag = 'scoped memory for tpu_custom_call.1']
    #allocation11 [shape = 'u8[16384]{0}', space=vmem, size = 0x4000, scoped, tag = 'output window, operand 0']
    %7 = vsyncpa [#allocation7], 0
    %s8 = scalar_lea.sflag [#allocation7], 1
    %9 = vsyncpa %s8, 0
    %10 = vsyncpa [#allocation10], 0
    %11 = vsyncpa [#allocation8], 0
    %s12 = scalar_lea.sflag [#allocation8], 1
    %13 = vsyncpa %s12, 0
    loop: start=0, step=1, limit=4
    $region2: #{tpu_custom_call.1} parent=1 // loop_pre_header
      _
    $region3: #{tpu_custom_call.1} parent=1 // loop_header
      %s15 = sphi 0, %s19
      %p16 = scmp.ge.s32.totalorder %s15, 4
      %s22 = sphi 0, %s41
      %s23 = sphi 0, %s37
      %s24 = sphi 0, %s33
      %s25 = sphi 0, %s22
      %s26 = sphi 0, %s23
      %s27 = sphi 0, %s24
      %s28 = sphi 0, %s25
      %s29 = sphi 0, %s26
      %s30 = sphi 0, %s27
      %s46 = sphi 0, %s48
      %s49 = sphi 0, %s46
      %s50 = sphi 0, %s49
      %s66 = sphi 0, %s50
      %s72 = sphi 0, %s74
      %s75 = sphi 0, %s72
      %s76 = sphi 0, %s75
      %s92 = sphi 0, %s76
      %s100 = sphi 0, %s102
      %s103 = sphi 0, %s100
      %s104 = sphi 0, %s103
      %s120 = sphi 0, %s104
    $region4: #{tpu_custom_call.1} parent=1 // loop_header_branch
      %18 = sbr.rel (%p16) target = $region8
    $region5: #{tpu_custom_call.1} parent=1 // loop_body
      %s20 = ssub.s32 %s15, 1
      %s21 = ssub.s32 %s15, 2
      %s31 = sadd.s32 1, %s24
      %p32 = scmp.ge.s32.totalorder %s31, 1
      %s33 = scalar_select %p32, 0, %s31
      %s34 = sadd.s32 1, %s23
      %s35 = scalar_select %p32, %s34, %s23
      %p36 = scmp.ge.s32.totalorder %s35, 1
      %s37 = scalar_select %p36, 0, %s35
      %s38 = sadd.s32 1, %s22
      %s39 = scalar_select %p36, %s38, %s22
      %p40 = scmp.ge.s32.totalorder %s39, 2
      %s41 = scalar_select %p40, 0, %s39
      %s42 = ssub.s32 %s22, %s41
      %s43 = ssub.s32 %s24, %s33
      %s44 = sor.u32 %s42, %s43
      %p45 = scmp.eq.s32.totalorder %s44, 0
      %s47 = sadd.s32 %s46, 1
      %s48 = scalar_select %p45, %s46, %s47
      %p51 = pneg %p45
      %p52 = scmp.eq.s32.totalorder %s15, 1
      %p53 = por %p51, %p52
      %p54 = scmp.ne.s32.totalorder %s46, %s49
      %p55 = scmp.eq.s32.totalorder %s15, 0
      %p56 = por %p54, %p55
      %p57 = scmp.ne.s32.totalorder %s46, %s49
      %p58 = scmp.eq.s32.totalorder %s20, 1
      %p59 = por %p57, %p58
      %p60 = scmp.ne.s32.totalorder %s49, %s50
      %p61 = scmp.eq.s32.totalorder %s20, 0
      %p62 = por %p60, %p61
      %p63 = scmp.ne.s32.totalorder %s49, %s50
      %p64 = scmp.eq.s32.totalorder %s21, 1
      %p65 = por %p63, %p64
      %p67 = scmp.ne.s32.totalorder %s50, %s66
      %p68 = scmp.eq.s32.totalorder %s21, 0
      %p69 = por %p67, %p68
      %s70 = ssub.s32 %s23, %s37
      %p71 = scmp.eq.s32.totalorder %s70, 0
      %s73 = sadd.s32 %s72, 1
      %s74 = scalar_select %p71, %s72, %s73
      %p77 = pneg %p71
      %p78 = scmp.eq.s32.totalorder %s15, 1
      %p79 = por %p77, %p78
      %p80 = scmp.ne.s32.totalorder %s72, %s75
      %p81 = scmp.eq.s32.totalorder %s15, 0
      %p82 = por %p80, %p81
      %p83 = scmp.ne.s32.totalorder %s72, %s75
      %p84 = scmp.eq.s32.totalorder %s20, 1
      %p85 = por %p83, %p84
      %p86 = scmp.ne.s32.totalorder %s75, %s76
      %p87 = scmp.eq.s32.totalorder %s20, 0
      %p88 = por %p86, %p87
      %p89 = scmp.ne.s32.totalorder %s75, %s76
      %p90 = scmp.eq.s32.totalorder %s21, 1
      %p91 = por %p89, %p90
      %p93 = scmp.ne.s32.totalorder %s76, %s92
      %p94 = scmp.eq.s32.totalorder %s21, 0
      %p95 = por %p93, %p94
      %s96 = ssub.s32 %s22, %s41
      %s97 = ssub.s32 %s23, %s37
      %s98 = sor.u32 %s96, %s97
      %p99 = scmp.eq.s32.totalorder %s98, 0
      %s101 = sadd.s32 %s100, 1
      %s102 = scalar_select %p99, %s100, %s101
      %p105 = pneg %p99
      %p106 = scmp.eq.s32.totalorder %s15, 1
      %p107 = por %p105, %p106
      %p108 = scmp.ne.s32.totalorder %s100, %s103
      %p109 = scmp.eq.s32.totalorder %s15, 0
      %p110 = por %p108, %p109
      %p111 = scmp.ne.s32.totalorder %s100, %s103
      %p112 = scmp.eq.s32.totalorder %s20, 1
      %p113 = por %p111, %p112
      %p114 = scmp.ne.s32.totalorder %s103, %s104
      %p115 = scmp.eq.s32.totalorder %s20, 0
      %p116 = por %p114, %p115
      %p117 = scmp.ne.s32.totalorder %s103, %s104
      %p118 = scmp.eq.s32.totalorder %s21, 1
      %p119 = por %p117, %p118
      %p121 = scmp.ne.s32.totalorder %s104, %s120
      %p122 = scmp.eq.s32.totalorder %s21, 0
      %p123 = por %p121, %p122
      %p124 = scmp.le.s32.totalorder 1, %s15
      %p125 = scmp.lt.s32.totalorder %s15, 3
      %p126 = pnand %p124, %p125
      %p127 = pneg %p126
      // Predicated region
      $region9: #{tpu_custom_call.1} parent=5 // pred_check
        _
      $region10: #{tpu_custom_call.1} parent=5 // pred_check_branch
        %129 = sbr.rel (%p126) target = $region12
      $region11: #{tpu_custom_call.1} parent=5 // pred_region
        %s130 = ssub.s32 %s15, 1
        // Predicated region
        $region13: #{tpu_custom_call.1} parent=11 // pred_check
          %p131 = pneg %p88
        $region14: #{tpu_custom_call.1} parent=11 // pred_check_branch
          %133 = sbr.rel (%p131) target = $region16
        $region15: #{tpu_custom_call.1} parent=11 // pred_region
          %s134 = smul.u32 2, %s26
          %s136 = ssub.s32 64, 64
          %137 = vsyncadd [#allocation10], %s136
          %s138 = smul.addr %s134, 32
          %s139 = scalar_lea.hbm %s1, %s138
          %s141 = sshll.u32 [#allocation9], 4
          %s142 = int_to_ptr.vmem [resolvable:$true] %s141
          %144 = dma.hbm_to_vmem [thread:$0]  %s139, 64, %s142, [#allocation10]
        $region16: #{tpu_custom_call.1} parent=11 // pred_fallthru
          _
      $region12: #{tpu_custom_call.1} parent=5 // pred_fallthru
        _
      %p145 = scmp.lt.s32.totalorder %s15, 2
      // Predicated region
      $region17: #{tpu_custom_call.1} parent=5 // pred_check
        %p146 = pneg %p145
      $region18: #{tpu_custom_call.1} parent=5 // pred_check_branch
        %148 = sbr.rel (%p146) target = $region20
      $region19: #{tpu_custom_call.1} parent=5 // pred_region
        // Predicated region
        $region21: #{tpu_custom_call.1} parent=19 // pred_check
          %p149 = pneg %p56
        $region22: #{tpu_custom_call.1} parent=19 // pred_check_branch
          %151 = sbr.rel (%p149) target = $region24
        $region23: #{tpu_custom_call.1} parent=19 // pred_region
          %s152 = sand.u32 %s46, 1
          %s153 = scalar_lea.sflag [#allocation7], %s152
          %s154 = sand.u32 %s46, 1
          %s155 = smul.addr %s154, 16
          %s156 = scalar_lea.vmem [#allocation6], %s155
          %s157 = smul.u32 2, %s24
          %s159 = ssub.s32 256, 256
          %160 = vsyncadd %s153, %s159
          %s161 = smul.addr %s22, 2
          %s162 = sadd.s32 %s157, %s161
          %s163 = smul.addr %s162, 128
          %s164 = scalar_lea.hbm %s0, %s163
          %s165 = sshll.u32 %s156, 4
          %s166 = int_to_ptr.vmem [resolvable:$true] %s165
          %171 = dma.hbm_to_vmem [thread:$0]  %s164, 256, %s166, %s153, 128, 128, 8
        $region24: #{tpu_custom_call.1} parent=19 // pred_fallthru
          _
      $region20: #{tpu_custom_call.1} parent=5 // pred_fallthru
        _
      %p172 = scmp.le.s32.totalorder 1, %s15
      %p173 = scmp.lt.s32.totalorder %s15, 3
      %p174 = pnand %p172, %p173
      %p175 = pneg %p174
      // Predicated region
      $region25: #{tpu_custom_call.1} parent=5 // pred_check
        _
      $region26: #{tpu_custom_call.1} parent=5 // pred_check_branch
        %177 = sbr.rel (%p174) target = $region28
      $region27: #{tpu_custom_call.1} parent=5 // pred_region
        %s178 = ssub.s32 %s15, 1
        %s179 = sand.u32 %s49, 1
        %s180 = scalar_lea.sflag [#allocation7], %s179
        %s181 = sand.u32 %s49, 1
        %s182 = smul.addr %s181, 16
        %s183 = scalar_lea.vmem [#allocation6], %s182
        // Predicated region
        $region29: #{tpu_custom_call.1} parent=27 // pred_check
          %p184 = pneg %p62
        $region30: #{tpu_custom_call.1} parent=27 // pred_check_branch
          %186 = sbr.rel (%p184) target = $region32
        $region31: #{tpu_custom_call.1} parent=27 // pred_region
          %187 = dma.done %s180, 256
        $region32: #{tpu_custom_call.1} parent=27 // pred_fallthru
          _
        // Predicated region
        $region33: #{tpu_custom_call.1} parent=27 // pred_check
          %p188 = pneg %p88
        $region34: #{tpu_custom_call.1} parent=27 // pred_check_branch
          %190 = sbr.rel (%p188) target = $region36
        $region35: #{tpu_custom_call.1} parent=27 // pred_region
          %191 = dma.done [#allocation10], 64
        $region36: #{tpu_custom_call.1} parent=27 // pred_fallthru
          _
        %s192 = sand.u32 %s49, 1
        %s193 = scalar_lea.sflag [#allocation7], %s192
        %s194 = sand.u32 %s49, 1
        %s195 = smul.addr %s194, 16
        %s196 = scalar_lea.vmem [#allocation6], %s195
        %p197 = pneg %p62
        %p198 = pneg %p59
        %p199 = pneg %p88
        %p200 = pneg %p85
        %p201 = pneg %p116
        %p202 = pneg %p113
        %s203 = sand.u32 %s103, 1
        %s204 = scalar_lea.sflag [#allocation8], %s203
        %s205 = sand.u32 %s103, 1
        %s206 = smul.addr %s205, 16
        %s207 = scalar_lea.vmem [#allocation11], %s206
        %s208 = smul.u32 2, %s27
        %s209 = smul.u32 2, %s26
        %s210 = smul.u32 2, %s26
        %p211 = scmp.eq.s32.totalorder %s27, 0
        // Predicated region
        $region37: #{tpu_custom_call.1} parent=27 // pred_check
          %p212 = pneg %p211
        $region38: #{tpu_custom_call.1} parent=27 // pred_check_branch
          %214 = sbr.rel (%p212) target = $region40
        $region39: #{tpu_custom_call.1} parent=27 // pred_region
          %215 = vst [vmem:[#allocation2] sm:$0xff] 1e+30
          %216 = vst [vmem:[#allocation2 + $0x8] sm:$0xff] 1e+30
          %217 = vst [vmem:[#allocation3] sm:$0xff] 0.0
          %218 = vst [vmem:[#allocation3 + $0x8] sm:$0xff] 0.0
          %219 = vst [vmem:[#allocation4] sm:$0xff] 0.0
          %220 = vst [vmem:[#allocation4 + $0x8] sm:$0xff] 0.0
          %221 = vst [vmem:[#allocation5] sm:$0xff] 0.0
          %222 = vst [vmem:[#allocation5 + $0x8] sm:$0xff] 0.0
        $region40: #{tpu_custom_call.1} parent=27 // pred_fallthru
          _
        %v223 = vld [vmem:[#allocation9] ss:$2 sm:$0x3]
        %v225 = vlaneseq
        %v226 = vshrl.u32 %v225, 7
        %v227 = vsub.s32 0, %v226
        %v228 = vrot.slane %v223, %v227
        %v229 = vlaneseq
        %v230 = vshrl.u32 %v229, 7
        %v231 = vsub.s32 1, %v230
        %v232 = vrot.slane %v223, %v231
        %s235 = scalar_lea.vmem [#allocation9], 1
        %v236 = vld [vmem:[%s235] ss:$2 sm:$0x3]
        %v238 = vlaneseq
        %v239 = vshrl.u32 %v238, 7
        %v240 = vsub.s32 0, %v239
        %v241 = vrot.slane %v236, %v240
        %v242 = vlaneseq
        %v243 = vshrl.u32 %v242, 7
        %v244 = vsub.s32 1, %v243
        %v245 = vrot.slane %v236, %v244
        loop: start=0, step=1, limit=2
        $region41: #{tpu_custom_call.1} parent=27 // loop_pre_header
          _
        $region42: #{tpu_custom_call.1} parent=27 // loop_header
          %s249 = sphi 0, %s253
          %p250 = scmp.ge.s32.totalorder %s249, 2
        $region43: #{tpu_custom_call.1} parent=27 // loop_header_branch
          %252 = sbr.rel (%p250) target = $region47
        $region44: #{tpu_custom_call.1} parent=27 // loop_body
          %s254 = smul.u32 %s249, 8
          %s255 = scalar_lea.vmem %s183, %s254 [#allocation6]
          %v256 = vld [vmem:[%s255] sm:$0xff]
          %258 = vset.pattern.permute.xlu0 0
          %259 = vperm.xlu0 %258, %v256
          %v260 = vpop.permute.xlu0 %259
          %v262 = vmul.f32 %v260, %v228
          %v263 = vmul.f32 %v260, %v232
          %264 = vset.pattern.permute.xlu0 1
          %265 = vperm.xlu0 %264, %v256
          %v266 = vpop.permute.xlu0 %265
          %v268 = vmul.f32 %v266, %v241
          %v269 = vmul.f32 %v266, %v245
          %v270 = vadd.f32 %v262, %v268
          %v271 = vadd.f32 %v263, %v269
          %272 = vset.pattern.permute.xlu0 2
          %273 = vperm.xlu0 %272, %v256
          %v274 = vpop.permute.xlu0 %273
          %v276 = vadd.f32 %v270, %v274
          %v277 = vadd.f32 %v271, %v274
          %278 = vset.pattern.permute.xlu0 3
          %279 = vperm.xlu0 %278, %v256
          %v280 = vpop.permute.xlu0 %279
          %v282 = vmul.f32 %v280, %v228
          %v283 = vmul.f32 %v280, %v232
          %284 = vset.pattern.permute.xlu0 4
          %285 = vperm.xlu0 %284, %v256
          %v286 = vpop.permute.xlu0 %285
          %v288 = vmul.f32 %v286, %v241
          %v289 = vmul.f32 %v286, %v245
          %v290 = vadd.f32 %v282, %v288
          %v291 = vadd.f32 %v283, %v289
          %292 = vset.pattern.permute.xlu0 5
          %293 = vperm.xlu0 %292, %v256
          %v294 = vpop.permute.xlu0 %293
          %v296 = vadd.f32 %v290, %v294
          %v297 = vadd.f32 %v291, %v294
          %v298 = vsub.f32 1.0, %v276
          %v299 = vsub.f32 1.0, %v277
          %v300 = vsub.f32 %v298, %v296
          %v301 = vsub.f32 %v299, %v297
          %302 = vset.pattern.permute.xlu0 6
          %303 = vperm.xlu0 %302, %v256
          %v304 = vpop.permute.xlu0 %303
          %v306 = vmul.f32 %v304, %v228
          %v307 = vmul.f32 %v304, %v232
          %308 = vset.pattern.permute.xlu0 7
          %309 = vperm.xlu0 %308, %v256
          %v310 = vpop.permute.xlu0 %309
          %v312 = vmul.f32 %v310, %v241
          %v313 = vmul.f32 %v310, %v245
          %v314 = vadd.f32 %v306, %v312
          %v315 = vadd.f32 %v307, %v313
          %316 = vset.pattern.permute.xlu0 8
          %317 = vperm.xlu0 %316, %v256
          %v318 = vpop.permute.xlu0 %317
          %v320 = vadd.f32 %v314, %v318
          %v321 = vadd.f32 %v315, %v318
          %vm322 = vcmp.ge.f32.partialorder %v276, 0.0
          %vm323 = vcmp.ge.f32.partialorder %v277, 0.0
          %vm324 = vcmp.ge.f32.partialorder %v296, 0.0
          %vm325 = vcmp.ge.f32.partialorder %v297, 0.0
          %vm326 = vmand %vm322, %vm324
          %vm327 = vmand %vm323, %vm325
          %vm328 = vcmp.ge.f32.partialorder %v300, 0.0
          %vm329 = vcmp.ge.f32.partialorder %v301, 0.0
          %vm330 = vmand %vm326, %vm328
          %vm331 = vmand %vm327, %vm329
          %vm332 = vcmp.gt.f32.partialorder %v320, 0.0
          %vm333 = vcmp.gt.f32.partialorder %v321, 0.0
          %vm334 = vmand %vm330, %vm332
          %vm335 = vmand %vm331, %vm333
          %v336 = vsel %vm334, %v320, 1e+30
          %v337 = vsel %vm335, %v321, 1e+30
          %v338 = vld [vmem:[#allocation2] sm:$0xff]
          %v339 = vld [vmem:[#allocation2 + $0x8] sm:$0xff]
          %vm340 = vcmp.lt.f32.partialorder %v336, %v338
          %vm341 = vcmp.lt.f32.partialorder %v337, %v339
          %v342 = vsel %vm340, %v336, %v338
          %v343 = vsel %vm341, %v337, %v339
          %344 = vst [vmem:[#allocation2] sm:$0xff] %v342
          %345 = vst [vmem:[#allocation2 + $0x8] sm:$0xff] %v343
          %346 = vset.pattern.permute.xlu0 9
          %347 = vperm.xlu0 %346, %v256
          %v348 = vpop.permute.xlu0 %347
          %v350 = vmul.f32 %v348, %v228
          %v351 = vmul.f32 %v348, %v232
          %352 = vset.pattern.permute.xlu0 10
          %353 = vperm.xlu0 %352, %v256
          %v354 = vpop.permute.xlu0 %353
          %v356 = vmul.f32 %v354, %v241
          %v357 = vmul.f32 %v354, %v245
          %v358 = vadd.f32 %v350, %v356
          %v359 = vadd.f32 %v351, %v357
          %360 = vset.pattern.permute.xlu0 11
          %361 = vperm.xlu0 %360, %v256
          %v362 = vpop.permute.xlu0 %361
          %v364 = vadd.f32 %v358, %v362
          %v365 = vadd.f32 %v359, %v362
          %v366 = vld [vmem:[#allocation3] sm:$0xff]
          %v367 = vld [vmem:[#allocation3 + $0x8] sm:$0xff]
          %v368 = vsel %vm340, %v364, %v366
          %v369 = vsel %vm341, %v365, %v367
          %370 = vst [vmem:[#allocation3] sm:$0xff] %v368
          %371 = vst [vmem:[#allocation3 + $0x8] sm:$0xff] %v369
          %372 = vset.pattern.permute.xlu0 12
          %373 = vperm.xlu0 %372, %v256
          %v374 = vpop.permute.xlu0 %373
          %v376 = vmul.f32 %v374, %v228
          %v377 = vmul.f32 %v374, %v232
          %378 = vset.pattern.permute.xlu0 13
          %379 = vperm.xlu0 %378, %v256
          %v380 = vpop.permute.xlu0 %379
          %v382 = vmul.f32 %v380, %v241
          %v383 = vmul.f32 %v380, %v245
          %v384 = vadd.f32 %v376, %v382
          %v385 = vadd.f32 %v377, %v383
          %386 = vset.pattern.permute.xlu0 14
          %387 = vperm.xlu0 %386, %v256
          %v388 = vpop.permute.xlu0 %387
          %v390 = vadd.f32 %v384, %v388
          %v391 = vadd.f32 %v385, %v388
          %v392 = vld [vmem:[#allocation4] sm:$0xff]
          %v393 = vld [vmem:[#allocation4 + $0x8] sm:$0xff]
          %v394 = vsel %vm340, %v390, %v392
          %v395 = vsel %vm341, %v391, %v393
          %396 = vst [vmem:[#allocation4] sm:$0xff] %v394
          %397 = vst [vmem:[#allocation4 + $0x8] sm:$0xff] %v395
          %398 = vset.pattern.permute.xlu0 15
          %399 = vperm.xlu0 %398, %v256
          %v400 = vpop.permute.xlu0 %399
          %v402 = vmul.f32 %v400, %v228
          %v403 = vmul.f32 %v400, %v232
          %404 = vset.pattern.permute.xlu0 16
          %405 = vperm.xlu0 %404, %v256
          %v406 = vpop.permute.xlu0 %405
          %v408 = vmul.f32 %v406, %v241
          %v409 = vmul.f32 %v406, %v245
          %v410 = vadd.f32 %v402, %v408
          %v411 = vadd.f32 %v403, %v409
          %412 = vset.pattern.permute.xlu0 17
          %413 = vperm.xlu0 %412, %v256
          %v414 = vpop.permute.xlu0 %413
          %v416 = vadd.f32 %v410, %v414
          %v417 = vadd.f32 %v411, %v414
          %v418 = vld [vmem:[#allocation5] sm:$0xff]
          %v419 = vld [vmem:[#allocation5 + $0x8] sm:$0xff]
          %v420 = vsel %vm340, %v416, %v418
          %v421 = vsel %vm341, %v417, %v419
          %422 = vst [vmem:[#allocation5] sm:$0xff] %v420
          %423 = vst [vmem:[#allocation5 + $0x8] sm:$0xff] %v421
        $region45: #{tpu_custom_call.1} parent=27 // loop_footer
          %s253 = sadd.s32 1, %s249
        $region46: #{tpu_custom_call.1} parent=27 // loop_footer_branch
          %248 = sbr.rel target = $region42
        $region47: #{tpu_custom_call.1} parent=27 // loop_exit
          _
        // Predicated region
        $region48: #{tpu_custom_call.1} parent=27 // pred_check
          %p424 = pneg %p211
        $region49: #{tpu_custom_call.1} parent=27 // pred_check_branch
          %426 = sbr.rel (%p424) target = $region51
        $region50: #{tpu_custom_call.1} parent=27 // pred_region
          %v427 = vld [vmem:[#allocation2] ss:$8 sm:$0x3]
          %v428 = vld [vmem:[#allocation3] ss:$8 sm:$0x3]
          %v429 = vld [vmem:[#allocation4] ss:$8 sm:$0x3]
          %v430 = vld [vmem:[#allocation5] ss:$8 sm:$0x3]
          %s431 = scalar_lea.vmem [#allocation2], 1
          %v432 = vld [vmem:[%s431] ss:$8 sm:$0x3]
          %vm433 = vcmp.lt.f32.partialorder %v432, %v427
          %v434 = vsel %vm433, %v432, %v427
          %s435 = scalar_lea.vmem [#allocation3], 1
          %v436 = vld [vmem:[%s435] ss:$8 sm:$0x3]
          %v437 = vsel %vm433, %v436, %v428
          %s438 = scalar_lea.vmem [#allocation4], 1
          %v439 = vld [vmem:[%s438] ss:$8 sm:$0x3]
          %v440 = vsel %vm433, %v439, %v429
          %s441 = scalar_lea.vmem [#allocation5], 1
          %v442 = vld [vmem:[%s441] ss:$8 sm:$0x3]
          %v443 = vsel %vm433, %v442, %v430
          %s444 = scalar_lea.vmem [#allocation2], 2
          %v445 = vld [vmem:[%s444] ss:$8 sm:$0x3]
          %vm446 = vcmp.lt.f32.partialorder %v445, %v434
          %v447 = vsel %vm446, %v445, %v434
          %s448 = scalar_lea.vmem [#allocation3], 2
          %v449 = vld [vmem:[%s448] ss:$8 sm:$0x3]
          %v450 = vsel %vm446, %v449, %v437
          %s451 = scalar_lea.vmem [#allocation4], 2
          %v452 = vld [vmem:[%s451] ss:$8 sm:$0x3]
          %v453 = vsel %vm446, %v452, %v440
          %s454 = scalar_lea.vmem [#allocation5], 2
          %v455 = vld [vmem:[%s454] ss:$8 sm:$0x3]
          %v456 = vsel %vm446, %v455, %v443
          %s457 = scalar_lea.vmem [#allocation2], 3
          %v458 = vld [vmem:[%s457] ss:$8 sm:$0x3]
          %vm459 = vcmp.lt.f32.partialorder %v458, %v447
          %v460 = vsel %vm459, %v458, %v447
          %s461 = scalar_lea.vmem [#allocation3], 3
          %v462 = vld [vmem:[%s461] ss:$8 sm:$0x3]
          %v463 = vsel %vm459, %v462, %v450
          %s464 = scalar_lea.vmem [#allocation4], 3
          %v465 = vld [vmem:[%s464] ss:$8 sm:$0x3]
          %v466 = vsel %vm459, %v465, %v453
          %s467 = scalar_lea.vmem [#allocation5], 3
          %v468 = vld [vmem:[%s467] ss:$8 sm:$0x3]
          %v469 = vsel %vm459, %v468, %v456
          %s470 = scalar_lea.vmem [#allocation2], 4
          %v471 = vld [vmem:[%s470] ss:$8 sm:$0x3]
          %vm472 = vcmp.lt.f32.partialorder %v471, %v460
          %v473 = vsel %vm472, %v471, %v460
          %s474 = scalar_lea.vmem [#allocation3], 4
          %v475 = vld [vmem:[%s474] ss:$8 sm:$0x3]
          %v476 = vsel %vm472, %v475, %v463
          %s477 = scalar_lea.vmem [#allocation4], 4
          %v478 = vld [vmem:[%s477] ss:$8 sm:$0x3]
          %v479 = vsel %vm472, %v478, %v466
          %s480 = scalar_lea.vmem [#allocation5], 4
          %v481 = vld [vmem:[%s480] ss:$8 sm:$0x3]
          %v482 = vsel %vm472, %v481, %v469
          %s483 = scalar_lea.vmem [#allocation2], 5
          %v484 = vld [vmem:[%s483] ss:$8 sm:$0x3]
          %vm485 = vcmp.lt.f32.partialorder %v484, %v473
          %v486 = vsel %vm485, %v484, %v473
          %s487 = scalar_lea.vmem [#allocation3], 5
          %v488 = vld [vmem:[%s487] ss:$8 sm:$0x3]
          %v489 = vsel %vm485, %v488, %v476
          %s490 = scalar_lea.vmem [#allocation4], 5
          %v491 = vld [vmem:[%s490] ss:$8 sm:$0x3]
          %v492 = vsel %vm485, %v491, %v479
          %s493 = scalar_lea.vmem [#allocation5], 5
          %v494 = vld [vmem:[%s493] ss:$8 sm:$0x3]
          %v495 = vsel %vm485, %v494, %v482
          %s496 = scalar_lea.vmem [#allocation2], 6
          %v497 = vld [vmem:[%s496] ss:$8 sm:$0x3]
          %vm498 = vcmp.lt.f32.partialorder %v497, %v486
          %v499 = vsel %vm498, %v497, %v486
          %s500 = scalar_lea.vmem [#allocation3], 6
          %v501 = vld [vmem:[%s500] ss:$8 sm:$0x3]
          %v502 = vsel %vm498, %v501, %v489
          %s503 = scalar_lea.vmem [#allocation4], 6
          %v504 = vld [vmem:[%s503] ss:$8 sm:$0x3]
          %v505 = vsel %vm498, %v504, %v492
          %s506 = scalar_lea.vmem [#allocation5], 6
          %v507 = vld [vmem:[%s506] ss:$8 sm:$0x3]
          %v508 = vsel %vm498, %v507, %v495
          %s509 = scalar_lea.vmem [#allocation2], 7
          %v510 = vld [vmem:[%s509] ss:$8 sm:$0x3]
          %vm511 = vcmp.lt.f32.partialorder %v510, %v499
          %v512 = vsel %vm511, %v510, %v499
          %s513 = scalar_lea.vmem [#allocation3], 7
          %v514 = vld [vmem:[%s513] ss:$8 sm:$0x3]
          %v515 = vsel %vm511, %v514, %v502
          %s516 = scalar_lea.vmem [#allocation4], 7
          %v517 = vld [vmem:[%s516] ss:$8 sm:$0x3]
          %v518 = vsel %vm511, %v517, %v505
          %s519 = scalar_lea.vmem [#allocation5], 7
          %v520 = vld [vmem:[%s519] ss:$8 sm:$0x3]
          %v521 = vsel %vm511, %v520, %v508
          %vm522 = vcmp.lt.f32.partialorder %v512, 5e+29
          %v523 = vsel %vm522, %v515, 0.0
          %v524 = vlaneseq
          %vm525 = vcmp.ge.s32.totalorder %v524, 0
          %vm526 = vcmp.lt.s32.totalorder %v524, 256
          %vm527 = vmand %vm525, %vm526
          %528 = vst.msk [vmem:[%s207] ss:$8 sm:$0x3] %vm527, %v523
          %529 = vst.msk [vmem:[%s207] ss:$8 sm:$0x0] %vm527, %v523
          %v530 = vsel %vm522, %v518, 0.0
          %s531 = scalar_lea.vmem %s207, 1 [#allocation11]
          %532 = vst.msk [vmem:[%s531] ss:$8 sm:$0x3] %vm527, %v530
          %533 = vst.msk [vmem:[%s531] ss:$8 sm:$0x0] %vm527, %v530
          %v534 = vsel %vm522, %v521, 0.0
          %s535 = scalar_lea.vmem %s207, 2 [#allocation11]
          %536 = vst.msk [vmem:[%s535] ss:$8 sm:$0x3] %vm527, %v534
          %537 = vst.msk [vmem:[%s535] ss:$8 sm:$0x0] %vm527, %v534
          %v538 = vsel %vm522, 1.0, 0.0
          %s539 = scalar_lea.vmem %s207, 3 [#allocation11]
          %540 = vst.msk [vmem:[%s539] ss:$8 sm:$0x3] %vm527, %v538
          %541 = vst.msk [vmem:[%s539] ss:$8 sm:$0x0] %vm527, %v538
          %v542 = vsel %vm522, %v512, -1.0
          %s543 = scalar_lea.vmem %s207, 4 [#allocation11]
          %544 = vst.msk [vmem:[%s543] ss:$8 sm:$0x3] %vm527, %v542
          %545 = vst.msk [vmem:[%s543] ss:$8 sm:$0x0] %vm527, %v542
          %546 = vst [vmem:[%s207] sm:$0xe0] 0.0
          %547 = vst [vmem:[%s207 + $0x8] sm:$0xe0] 0.0
        $region51: #{tpu_custom_call.1} parent=27 // pred_fallthru
          _
        %s548 = sand.u32 %s103, 1
        %s549 = scalar_lea.sflag [#allocation8], %s548
        %s550 = sand.u32 %s103, 1
        %s551 = smul.addr %s550, 16
        %s552 = scalar_lea.vmem [#allocation11], %s551
        // Predicated region
        $region52: #{tpu_custom_call.1} parent=27 // pred_check
          %p553 = pneg %p113
        $region53: #{tpu_custom_call.1} parent=27 // pred_check_branch
          %555 = sbr.rel (%p553) target = $region55
        $region54: #{tpu_custom_call.1} parent=27 // pred_region
          %s556 = smul.u32 2, %s26
          %s558 = ssub.s32 256, 256
          %559 = vsyncadd %s549, %s558
          %s560 = smul.addr %s25, 2
          %s561 = sadd.s32 %s556, %s560
          %s562 = smul.addr %s561, 128
          %s563 = scalar_lea.hbm %s2, %s562
          %s565 = sshll.u32 %s552, 4
          %s566 = int_to_ptr.vmem [resolvable:$true] %s565
          %568 = dma.vmem_to_hbm [thread:$0]  %s566, 256, %s563, %s549
        $region55: #{tpu_custom_call.1} parent=27 // pred_fallthru
          _
      $region28: #{tpu_custom_call.1} parent=5 // pred_fallthru
        _
      %p569 = scmp.le.s32.totalorder 2, %s15
      // Predicated region
      $region56: #{tpu_custom_call.1} parent=5 // pred_check
        %p570 = pneg %p569
      $region57: #{tpu_custom_call.1} parent=5 // pred_check_branch
        %572 = sbr.rel (%p570) target = $region59
      $region58: #{tpu_custom_call.1} parent=5 // pred_region
        %s573 = ssub.s32 %s15, 2
        // Predicated region
        $region60: #{tpu_custom_call.1} parent=58 // pred_check
          %p574 = pneg %p119
        $region61: #{tpu_custom_call.1} parent=58 // pred_check_branch
          %576 = sbr.rel (%p574) target = $region63
        $region62: #{tpu_custom_call.1} parent=58 // pred_region
          %s577 = sand.u32 %s104, 1
          %s578 = scalar_lea.sflag [#allocation8], %s577
          %s579 = sand.u32 %s104, 1
          %s580 = smul.addr %s579, 16
          %s581 = scalar_lea.vmem [#allocation11], %s580
          %582 = dma.done %s578, 256
        $region63: #{tpu_custom_call.1} parent=58 // pred_fallthru
          _
      $region59: #{tpu_custom_call.1} parent=5 // pred_fallthru
        _
    $region6: #{tpu_custom_call.1} parent=1 // loop_footer
      %s19 = sadd.s32 1, %s15
    $region7: #{tpu_custom_call.1} parent=1 // loop_footer_branch
      %14 = sbr.rel target = $region3
    $region8: #{tpu_custom_call.1} parent=1 // loop_exit
      _
    %583 = vsyncpa [#allocation7], 1
    %s584 = scalar_lea.sflag [#allocation7], 1
    %585 = vsyncpa %s584, 1
    %586 = vsyncpa [#allocation10], 1
    %587 = vsyncpa [#allocation8], 1
    %s588 = scalar_lea.sflag [#allocation8], 1
    %589 = vsyncpa %s588, 1

</llo_original>
